<compile_context>
chip_gen: v7x
topology: tpu7x:2x2x1
jax: 0.10.0
libtpu: 0.0.40
codegen_flags: <defaults>
</compile_context>

<pallas_src>
import math
import functools

import jax
import jax.numpy as jnp
from jax.experimental import pallas as pl
from jax.experimental.pallas import tpu as pltpu


def _eca_kernel(x_ref, w_ref, b_ref, o_ref, *, channels, kernel_size, inv_hw):
    # x_ref / o_ref: (R, HWp) with R = nb * C rows (channel-major per batch).
    # w_ref: (k,) SMEM scalar taps ; b_ref: (1,) SMEM scalar bias.
    x = x_ref[...]
    xf = x.astype(jnp.float32)
    rows = x.shape[0]
    pad = (kernel_size - 1) // 2

    # 1) AdaptiveAvgPool2d((1,1)): sum over spatial lanes (padded lanes are 0),
    #    divide by the true H*W (hoisted static constant).
    pooled = jnp.sum(xf, axis=-1, keepdims=True) * inv_hw            # (R, 1) f32

    # 2) Conv1d(1, 1, k) along the channel axis as k shifted FMAs on the pooled
    #    column.  Zero padding handles the ends of the slab; the group mask
    #    enforces zero-padding at each batch element's channel boundary.
    zeros = jnp.zeros((pad, 1), jnp.float32)
    padded = jnp.concatenate([zeros, pooled, zeros], axis=0)         # (R+2p, 1)
    row_in_group = jax.lax.broadcasted_iota(jnp.int32, (rows, 1), 0) % channels
    acc = jnp.zeros((rows, 1), jnp.float32)
    for j in range(kernel_size):                                     # static, small
        s = j - pad
        shifted = jax.lax.slice_in_dim(padded, j, j + rows, axis=0)  # pooled[r+s]
        valid = jnp.logical_and(row_in_group + s >= 0, row_in_group + s < channels)
        acc = acc + w_ref[j] * jnp.where(valid, shifted, jnp.float32(0.0))

    # 3) Sigmoid gate (f32), broadcast over lanes, single load->mul->store pass.
    gate = jax.nn.sigmoid(acc + b_ref[0])                            # (R, 1)
    o_ref[...] = (xf * gate).astype(o_ref.dtype)


def efficient_channel_attention(x, conv_w, conv_b, *, block_bytes=4 << 20):
    """x: (N, C, H, W) float; conv_w: (k,) ; conv_b: (1,)."""
    N, C, H, W = x.shape
    k = conv_w.shape[0]
    hw = H * W
    hw_pad = -(-hw // 128) * 128                     # lane-dense last dim
    rows = N * C

    conv_w = conv_w.astype(jnp.float32)
    conv_b = conv_b.astype(jnp.float32)

    x2 = x.reshape(rows, hw)
    if hw_pad != hw:                                 # zeros don't change the sum
        x2 = jnp.pad(x2, ((0, 0), (0, hw_pad - hw)))

    # Rows per block: whole batch elements, sized toward block_bytes, with
    # (nb * C) % 8 == 0 (sublane-full tiles) unless one block covers all rows.
    itemsize = jnp.dtype(x.dtype).itemsize
    bytes_per_batch = max(1, C * hw_pad * itemsize)
    nb = max(1, min(N, block_bytes // bytes_per_batch))
    if nb < N and (nb * C) % 8 != 0:
        g = 8 // math.gcd(C, 8)
        nb = min(N, -(-nb // g) * g)
    if nb < N and (nb * C) % 8 != 0:
        nb = N
    block_rows = nb * C
    grid = -(-N // nb)
    # TODO(synk): for very large C*H*W (block >> VMEM, esp. v7x's 64 MiB) switch
    # to a two-pass pool / gated-multiply structure tiled over H*W.

    out2 = pl.pallas_call(
        functools.partial(_eca_kernel, channels=C, kernel_size=k, inv_hw=1.0 / hw),
        out_shape=jax.ShapeDtypeStruct((rows, hw_pad), x.dtype),
        grid_spec=pltpu.PrefetchScalarGridSpec(
            num_scalar_prefetch=0,
            grid=(grid,),
            in_specs=[
                pl.BlockSpec((block_rows, hw_pad), lambda i: (i, 0)),
                pl.BlockSpec(memory_space=pltpu.MemorySpace.SMEM),   # conv taps
                pl.BlockSpec(memory_space=pltpu.MemorySpace.SMEM),   # conv bias
            ],
            out_specs=pl.BlockSpec((block_rows, hw_pad), lambda i: (i, 0)),
        ),
        compiler_params=pltpu.CompilerParams(
            dimension_semantics=("parallel",),
            vmem_limit_bytes=48 << 20,
        ),
    )(x2, conv_w, conv_b)

    if hw_pad != hw:
        out2 = out2[:, :hw]
    return out2.reshape(N, C, H, W)


def eca_reference(x, conv_w, conv_b):
    """Pure-JAX reference mirroring the PyTorch forward."""
    N, C, H, W = x.shape
    k = conv_w.shape[0]
    pad = (k - 1) // 2
    pooled = x.astype(jnp.float32).mean(axis=(2, 3))                 # (N, C)
    padded = jnp.pad(pooled, ((0, 0), (pad, pad)))
    conv = conv_b[0] + sum(conv_w[j] * padded[:, j:j + C] for j in range(k))
    gate = jax.nn.sigmoid(conv)                                      # (N, C)
    return (x * gate[:, :, None, None].astype(x.dtype)).astype(x.dtype)


if __name__ == "__main__":
    # Module config: in_channels=4, gamma=2, beta=2  ->  k = 3
    in_channels, gamma, beta = 4, 2, 2
    t = int(abs((math.log(in_channels, 2) + beta) / gamma))
    k = max(t if t % 2 else t + 1, 3)

    key = jax.random.PRNGKey(0)
    kw, kb, kx = jax.random.split(key, 3)

    # Deterministic Conv1d(1, 1, k) parameter init (kaiming-uniform-style bound).
    bound = 1.0 / math.sqrt(k)
    conv_w = jax.random.uniform(kw, (k,), jnp.float32, -bound, bound)
    conv_b = jax.random.uniform(kb, (1,), jnp.float32, -bound, bound)

    x = jax.random.normal(kx, (2, in_channels, 16, 16), jnp.float32)

    out = efficient_channel_attention(x, conv_w, conv_b)
    out = jax.block_until_ready(out)

    ref = eca_reference(x, conv_w, conv_b)
    assert out.shape == x.shape and out.dtype == x.dtype
    assert jnp.allclose(out, ref, atol=1e-5, rtol=1e-5), "mismatch vs reference"

    print("KERNEL_OK")
</pallas_src>

<mosaic_0001>
module attributes {stable_mosaic.version = 11 : i64} {
  func.func @_eca_kernel(%arg0: i32, %arg1: memref<8x256xf32, #tpu.memory_space<vmem>>, %arg2: memref<3xf32, #tpu.memory_space<smem>>, %arg3: memref<1xf32, #tpu.memory_space<smem>>, %arg4: memref<8x256xf32, #tpu.memory_space<vmem>>) attributes {dimension_semantics = [#tpu.dimension_semantics<parallel>], iteration_bounds = array<i64: 1>, scalar_prefetch = 0 : i64, scratch_operands = 0 : i64, tpu.core_type = #tpu.core_type<tc>, window_params = [{transform_indices = @transform_0, window_bounds = array<i64: 8, 256>}, {transform_indices = @transform_1, window_bounds = array<i64: 3>}, {transform_indices = @transform_2, window_bounds = array<i64: 1>}, {transform_indices = @transform_3, window_bounds = array<i64: 8, 256>}]} {
    %c0 = arith.constant 0 : index
    %c0_0 = arith.constant 0 : index
    %0 = vector.load %arg1[%c0, %c0_0] : memref<8x256xf32, #tpu.memory_space<vmem>>, vector<8x256xf32>
    %cst = arith.constant dense<0.000000e+00> : vector<8xf32>
    %1 = vector.multi_reduction <add>, %0, %cst [1] : vector<8x256xf32> to vector<8xf32>
    %2 = vector.shape_cast %1 : vector<8xf32> to vector<8x1xf32>
    %cst_1 = arith.constant 3.906250e-03 : f32
    %3 = vector.broadcast %cst_1 : f32 to vector<8x1xf32>
    %4 = arith.mulf %2, %3 : vector<8x1xf32>
    %cst_2 = arith.constant 0.000000e+00 : f32
    %5 = vector.broadcast %cst_2 : f32 to vector<1x1xf32>
    %6 = tpu.concatenate %5, %4, %5 in 0 : vector<1x1xf32>, vector<8x1xf32>, vector<1x1xf32> -> vector<10x1xf32>
    %7 = tpu.iota {dimensions = array<i32: 0>} : vector<8x1xi32>
    %c4_i32 = arith.constant 4 : i32
    %c0_i32 = arith.constant 0 : i32
    %8 = arith.cmpi eq, %c4_i32, %c0_i32 : i32
    %c1_i32 = arith.constant 1 : i32
    %9 = arith.select %8, %c1_i32, %c4_i32 : i32
    %10 = vector.broadcast %9 : i32 to vector<8x1xi32>
    %11 = arith.remsi %7, %10 : vector<8x1xi32>
    %c0_i32_3 = arith.constant 0 : i32
    %12 = vector.broadcast %c0_i32_3 : i32 to vector<8x1xi32>
    %13 = arith.cmpi ne, %11, %12 : vector<8x1xi32>
    %c0_i32_4 = arith.constant 0 : i32
    %14 = vector.broadcast %c0_i32_4 : i32 to vector<8x1xi32>
    %15 = arith.cmpi slt, %11, %14 : vector<8x1xi32>
    %c0_i32_5 = arith.constant 0 : i32
    %16 = arith.cmpi slt, %9, %c0_i32_5 : i32
    %17 = vector.broadcast %16 : i1 to vector<8x1xi1>
    %18 = vector.broadcast %17 : vector<8x1xi1> to vector<8x1xi1>
    %19 = arith.xori %15, %18 : vector<8x1xi1>
    %20 = arith.andi %19, %13 : vector<8x1xi1>
    %21 = vector.broadcast %9 : i32 to vector<8x1xi32>
    %22 = arith.addi %11, %21 : vector<8x1xi32>
    %23 = arith.select %20, %22, %11 : vector<8x1xi1>, vector<8x1xi32>
    %cst_6 = arith.constant 0.000000e+00 : f32
    %24 = vector.broadcast %cst_6 : f32 to vector<8x1xf32>
    %25 = vector.extract_strided_slice %6 {offsets = [0, 0], sizes = [8, 1], strides = [1, 1]} : vector<10x1xf32> to vector<8x1xf32>
    %c-1_i32 = arith.constant -1 : i32
    %26 = vector.broadcast %c-1_i32 : i32 to vector<8x1xi32>
    %27 = arith.addi %23, %26 : vector<8x1xi32>
    %c0_i32_7 = arith.constant 0 : i32
    %28 = vector.broadcast %c0_i32_7 : i32 to vector<8x1xi32>
    %29 = arith.cmpi sge, %27, %28 : vector<8x1xi32>
    %c-1_i32_8 = arith.constant -1 : i32
    %30 = vector.broadcast %c-1_i32_8 : i32 to vector<8x1xi32>
    %31 = arith.addi %23, %30 : vector<8x1xi32>
    %c4_i32_9 = arith.constant 4 : i32
    %32 = vector.broadcast %c4_i32_9 : i32 to vector<8x1xi32>
    %33 = arith.cmpi slt, %31, %32 : vector<8x1xi32>
    %34 = arith.andi %29, %33 : vector<8x1xi1>
    %c0_10 = arith.constant 0 : index
    %35 = memref.load %arg2[%c0_10] : memref<3xf32, #tpu.memory_space<smem>>
    %cst_11 = arith.constant 0.000000e+00 : f32
    %36 = vector.broadcast %cst_11 : f32 to vector<8x1xf32>
    %37 = arith.select %34, %25, %36 : vector<8x1xi1>, vector<8x1xf32>
    %38 = vector.broadcast %35 : f32 to vector<8x1xf32>
    %39 = arith.mulf %38, %37 : vector<8x1xf32>
    %40 = arith.addf %24, %39 : vector<8x1xf32>
    %41 = vector.extract_strided_slice %6 {offsets = [1, 0], sizes = [8, 1], strides = [1, 1]} : vector<10x1xf32> to vector<8x1xf32>
    %c0_i32_12 = arith.constant 0 : i32
    %42 = vector.broadcast %c0_i32_12 : i32 to vector<8x1xi32>
    %43 = arith.addi %23, %42 : vector<8x1xi32>
    %c0_i32_13 = arith.constant 0 : i32
    %44 = vector.broadcast %c0_i32_13 : i32 to vector<8x1xi32>
    %45 = arith.cmpi sge, %43, %44 : vector<8x1xi32>
    %c0_i32_14 = arith.constant 0 : i32
    %46 = vector.broadcast %c0_i32_14 : i32 to vector<8x1xi32>
    %47 = arith.addi %23, %46 : vector<8x1xi32>
    %c4_i32_15 = arith.constant 4 : i32
    %48 = vector.broadcast %c4_i32_15 : i32 to vector<8x1xi32>
    %49 = arith.cmpi slt, %47, %48 : vector<8x1xi32>
    %50 = arith.andi %45, %49 : vector<8x1xi1>
    %c1 = arith.constant 1 : index
    %51 = memref.load %arg2[%c1] : memref<3xf32, #tpu.memory_space<smem>>
    %cst_16 = arith.constant 0.000000e+00 : f32
    %52 = vector.broadcast %cst_16 : f32 to vector<8x1xf32>
    %53 = arith.select %50, %41, %52 : vector<8x1xi1>, vector<8x1xf32>
    %54 = vector.broadcast %51 : f32 to vector<8x1xf32>
    %55 = arith.mulf %54, %53 : vector<8x1xf32>
    %56 = arith.addf %40, %55 : vector<8x1xf32>
    %57 = vector.extract_strided_slice %6 {offsets = [2, 0], sizes = [8, 1], strides = [1, 1]} : vector<10x1xf32> to vector<8x1xf32>
    %c1_i32_17 = arith.constant 1 : i32
    %58 = vector.broadcast %c1_i32_17 : i32 to vector<8x1xi32>
    %59 = arith.addi %23, %58 : vector<8x1xi32>
    %c0_i32_18 = arith.constant 0 : i32
    %60 = vector.broadcast %c0_i32_18 : i32 to vector<8x1xi32>
    %61 = arith.cmpi sge, %59, %60 : vector<8x1xi32>
    %c1_i32_19 = arith.constant 1 : i32
    %62 = vector.broadcast %c1_i32_19 : i32 to vector<8x1xi32>
    %63 = arith.addi %23, %62 : vector<8x1xi32>
    %c4_i32_20 = arith.constant 4 : i32
    %64 = vector.broadcast %c4_i32_20 : i32 to vector<8x1xi32>
    %65 = arith.cmpi slt, %63, %64 : vector<8x1xi32>
    %66 = arith.andi %61, %65 : vector<8x1xi1>
    %c2 = arith.constant 2 : index
    %67 = memref.load %arg2[%c2] : memref<3xf32, #tpu.memory_space<smem>>
    %cst_21 = arith.constant 0.000000e+00 : f32
    %68 = vector.broadcast %cst_21 : f32 to vector<8x1xf32>
    %69 = arith.select %66, %57, %68 : vector<8x1xi1>, vector<8x1xf32>
    %70 = vector.broadcast %67 : f32 to vector<8x1xf32>
    %71 = arith.mulf %70, %69 : vector<8x1xf32>
    %72 = arith.addf %56, %71 : vector<8x1xf32>
    %c0_22 = arith.constant 0 : index
    %73 = memref.load %arg3[%c0_22] : memref<1xf32, #tpu.memory_space<smem>>
    %74 = vector.broadcast %73 : f32 to vector<8x1xf32>
    %75 = arith.addf %72, %74 : vector<8x1xf32>
    %76 = arith.negf %75 : vector<8x1xf32>
    %77 = math.exp %76 : vector<8x1xf32>
    %cst_23 = arith.constant 1.000000e+00 : f32
    %78 = vector.broadcast %cst_23 : f32 to vector<8x1xf32>
    %79 = arith.addf %78, %77 : vector<8x1xf32>
    %80 = arith.divf %78, %79 : vector<8x1xf32>
    %81 = vector.broadcast %80 : vector<8x1xf32> to vector<8x256xf32>
    %82 = arith.mulf %0, %81 : vector<8x256xf32>
    %c0_24 = arith.constant 0 : index
    %c0_25 = arith.constant 0 : index
    %83 = vector.load %arg4[%c0_24, %c0_25] : memref<8x256xf32, #tpu.memory_space<vmem>>, vector<8x256xf32>
    tpu.vector_store %arg4[%c0_24, %c0_25], %82 {strides = array<i32>} : memref<8x256xf32, #tpu.memory_space<vmem>>, vector<8x256xf32>,
    return
  }
  func.func @transform_0(%arg0: i32) -> (i32, i32) {
    %c0_i32 = arith.constant 0 : i32
    %c0_i32_0 = arith.constant 0 : i32
    return %arg0, %c0_i32 : i32, i32
  }
  func.func @transform_1(%arg0: i32) -> i32 {
    %c0_i32 = arith.constant 0 : i32
    %c0_i32_0 = arith.constant 0 : i32
    return %c0_i32 : i32
  }
  func.func @transform_2(%arg0: i32) -> i32 {
    %c0_i32 = arith.constant 0 : i32
    %c0_i32_0 = arith.constant 0 : i32
    return %c0_i32 : i32
  }
  func.func @transform_3(%arg0: i32) -> (i32, i32) {
    %c0_i32 = arith.constant 0 : i32
    %c0_i32_0 = arith.constant 0 : i32
    return %arg0, %c0_i32 : i32, i32
  }
}

</mosaic_0001>

<llo_original>
// kernel: tpu_custom_call.1
$region0: #{tpu_custom_call.1}
  #allocation0 [shape = 'u32[]', space=smem, size = 0x4, offset = 0x4, fixed_abs, tag = 'smem constant byte address 0x4 - core index']
  #allocation1 [shape = 'u32[144,128]{1,0:T(1,128)}', space=vmem, size = 0x12000, scoped, tag = 'internal scratch']
  #allocation2 [shape = 'f32[1]{0:T(128)S(6)}', space=smem, size = 0x200, scoped, tag = 'scoped memory for tpu_custom_call.1']
  %s0 = inlined_call_operand.hbm [shape: f32[8,256], index: 0, kind: input, shape index: {}]
  %s1 = inlined_call_operand.vmem [shape: f32[3], index: 1, kind: input, shape index: {}]
  %s2 = inlined_call_operand.<no memory space> [shape: f32[1], index: 2, kind: input, shape index: {}]
  %s3 = inlined_call_operand.hbm [shape: f32[8,256], index: 3, kind: output, shape index: {}]
  %s4 = sld [smem:[#allocation0]]
  $region30: #{tpu_custom_call.1} parent=0
    _
  %s6 = ssub.s32 1, %s4
  %s7 = scalar_select 0, %s6, %s4
  %8 = sst [smem:[#allocation2]] %s2
  $region1: #{tpu_custom_call.1} parent=0
    #allocation3 [shape = 'u8[8192]{0}', space=vmem, size = 0x2000, scoped, tag = 'input window, operand 0, single buffered']
    #allocation4 [shape = 's32[1]{0}', space=sflag, size = 0x4, scoped, tag = 'scoped memory for tpu_custom_call.1']
    #allocation5 [shape = 's32[1]{0}', space=sflag, size = 0x4, scoped, tag = 'scoped memory for tpu_custom_call.1']
    #allocation6 [shape = 's32[1]{0}', space=sflag, size = 0x4, scoped, tag = 'scoped memory for tpu_custom_call.1']
    #allocation7 [shape = 'u8[512]{0}', space=smem, size = 0x200, scoped, tag = 'input window, operand 1, single buffered']
    #allocation8 [shape = 'u8[8192]{0}', space=vmem, size = 0x2000, scoped, tag = 'output window, operand 0, single buffered']
    %9 = vsyncpa [#allocation4], 0
    %10 = vsyncpa [#allocation6], 0
    %11 = vsyncpa [#allocation5], 0
    // Predicated region
    $region2: #{tpu_custom_call.1} parent=1 // pred_check
      _
    $region3: #{tpu_custom_call.1} parent=1 // pred_check_branch
      %13 = sbr.rel (0) target = $region5
    $region4: #{tpu_custom_call.1} parent=1 // pred_region
      %s15 = ssub.s32 256, 256
      %16 = vsyncadd [#allocation4], %s15
      %s18 = sshll.u32 [#allocation3], 4
      %s19 = int_to_ptr.vmem [resolvable:$true] %s18
      %21 = dma.hbm_to_vmem [thread:$0]  %s0, 256, %s19, [#allocation4]
    $region5: #{tpu_custom_call.1} parent=1 // pred_fallthru
      _
    // Predicated region
    $region6: #{tpu_custom_call.1} parent=1 // pred_check
      _
    $region7: #{tpu_custom_call.1} parent=1 // pred_check_branch
      %23 = sbr.rel (0) target = $region9
    $region8: #{tpu_custom_call.1} parent=1 // pred_region
      %s25 = ssub.s32 16, 16
      %26 = vsyncadd [#allocation6], %s25
      %s28 = sshll.u32 %s1, 4
      %s29 = int_to_ptr.vmem [resolvable:$true] %s28
      %31 = dma.vmem_to_smem %s29, 16, [#allocation7], [#allocation6]
    $region9: #{tpu_custom_call.1} parent=1 // pred_fallthru
      _
    // Predicated region
    $region10: #{tpu_custom_call.1} parent=1 // pred_check
      _
    $region11: #{tpu_custom_call.1} parent=1 // pred_check_branch
      %33 = sbr.rel (0) target = $region13
    $region12: #{tpu_custom_call.1} parent=1 // pred_region
      _
    $region13: #{tpu_custom_call.1} parent=1 // pred_fallthru
      _
    // Predicated region
    $region14: #{tpu_custom_call.1} parent=1 // pred_check
      _
    $region15: #{tpu_custom_call.1} parent=1 // pred_check_branch
      %35 = sbr.rel (0) target = $region17
    $region16: #{tpu_custom_call.1} parent=1 // pred_region
      %36 = dma.done [#allocation4], 256
    $region17: #{tpu_custom_call.1} parent=1 // pred_fallthru
      _
    // Predicated region
    $region18: #{tpu_custom_call.1} parent=1 // pred_check
      _
    $region19: #{tpu_custom_call.1} parent=1 // pred_check_branch
      %38 = sbr.rel (0) target = $region21
    $region20: #{tpu_custom_call.1} parent=1 // pred_region
      %39 = dma.done [#allocation6], 16
    $region21: #{tpu_custom_call.1} parent=1 // pred_fallthru
      _
    %40 = sfence
    %v41 = vld [vmem:[#allocation3] sm:$0xff]
    %v42 = vld [vmem:[#allocation3 + $0x8] sm:$0xff]
    %v43 = vadd.f32 %v41, %v42
    %44 = vadd.xlane.f32.xlu0 %v43
    %v45 = vpop.xlane.xlu0 %44
    %v46 = vmul.f32 %v45, 0.00390625
    %v48 = vrot.slane %v46, 7
    %vm50 = vcmask 1040384
    %v51 = vsel %vm50, 0.0, %v48
    %v52 = vsel %vm50, %v48, 0.0
    %v53 = vlaneseq
    %v54 = vshrl.u32 %v53, 7
    %vm55 = vcmp.lt.s32.totalorder %v54, 0
    %v56 = vsub.s32 0, %v54
    %v57 = vsel %vm55, %v56, %v54
    %v58 = vshrl.u32 %v57, 2
    %v59 = vand.u32 %v57, 3
    %v60 = vsub.s32 0, %v59
    %v61 = vsel %vm55, %v60, %v59
    %vm62 = vcmp.ne.s32.totalorder %v61, 0
    %vm63 = vcmp.lt.s32.totalorder %v61, 0
    %vm64 = vmand %vm63, %vm62
    %v65 = vadd.s32 %v61, 4
    %v66 = vsel %vm64, %v65, %v61
    %v67 = vadd.s32 %v66, 4294967295
    %vm68 = vcmp.ge.s32.totalorder %v67, 0
    %vm69 = vcmp.lt.s32.totalorder %v67, 4
    %vm70 = vmand %vm68, %vm69
    %s71 = sld [smem:[#allocation7]]
    %v72 = vsel %vm70, %v51, 0.0
    %v73 = vstv %s71
    %v74 = vmul.f32 %v73, %v72
    %v75 = vadd.f32 %v74, 0.0
    %vm76 = vcmp.ge.s32.totalorder %v66, 0
    %vm77 = vcmp.lt.s32.totalorder %v66, 4
    %vm78 = vmand %vm76, %vm77
    %s79 = sld [smem:[#allocation7 + $0x1]]
    %vm82 = vcmask 1046528
    %v83 = vrot.slane %v51, 1
    %v84 = vrot.slane %v52, 1
    %v85 = vsel %vm82, %v83, %v84
    %v87 = vsel %vm78, %v85, 0.0
    %v88 = vstv %s79
    %v89 = vmul.f32 %v88, %v87
    %v90 = vadd.f32 %v75, %v89
    %v91 = vadd.s32 %v66, 1
    %vm92 = vcmp.ge.s32.totalorder %v91, 0
    %vm93 = vcmp.lt.s32.totalorder %v91, 4
    %vm94 = vmand %vm92, %vm93
    %s95 = sld [smem:[#allocation7 + $0x2]]
    %vm96 = vcmask 1045504
    %v97 = vrot.slane %v51, 2
    %v98 = vrot.slane %v52, 2
    %v99 = vsel %vm96, %v97, %v98
    %v101 = vsel %vm94, %v99, 0.0
    %v102 = vstv %s95
    %v103 = vmul.f32 %v102, %v101
    %v104 = vadd.f32 %v90, %v103
    %s105 = sld [smem:[#allocation2]]
    %v106 = vstv %s105
    %v107 = vadd.f32 %v104, %v106
    %v108 = vxor.u32 %v107, 2147483648
    %v109 = vmul.f32 %v108, 1.442695
    %v110 = vpow.pop %v109
    %v111 = vadd.f32 %v110, 1.0
    %v112 = vrcp.pop %v111
    %v113 = vmul.f32 1.0, %v112
    %115 = vset.pattern.permute.xlu0 0
    %116 = vperm.xlu0 %115, %v113
    %v117 = vpop.permute.xlu0 %116
    %v119 = vmul.f32 %v41, %v117
    %v120 = vmul.f32 %v42, %v117
    %121 = vst [vmem:[#allocation8] sm:$0xff] %v119
    %122 = vst [vmem:[#allocation8 + $0x8] sm:$0xff] %v120
    // Predicated region
    $region22: #{tpu_custom_call.1} parent=1 // pred_check
      _
    $region23: #{tpu_custom_call.1} parent=1 // pred_check_branch
      %124 = sbr.rel (0) target = $region25
    $region24: #{tpu_custom_call.1} parent=1 // pred_region
      %s126 = ssub.s32 256, 256
      %127 = vsyncadd [#allocation5], %s126
      %s129 = sshll.u32 [#allocation8], 4
      %s130 = int_to_ptr.vmem [resolvable:$true] %s129
      %132 = dma.vmem_to_hbm [thread:$0]  %s130, 256, %s3, [#allocation5]
    $region25: #{tpu_custom_call.1} parent=1 // pred_fallthru
      _
    // Predicated region
    $region26: #{tpu_custom_call.1} parent=1 // pred_check
      _
    $region27: #{tpu_custom_call.1} parent=1 // pred_check_branch
      %134 = sbr.rel (0) target = $region29
    $region28: #{tpu_custom_call.1} parent=1 // pred_region
      %135 = dma.done [#allocation5], 256
    $region29: #{tpu_custom_call.1} parent=1 // pred_fallthru
      _
    %136 = vsyncpa [#allocation4], 1
    %137 = vsyncpa [#allocation5], 1
    %138 = vsyncpa [#allocation6], 1

</llo_original>
